<compile_context>
chip_gen: v5e
topology: v5e:2x2
jax: 0.10.0
libtpu: 0.0.40
codegen_flags: <defaults>
</compile_context>

<pallas_src>
import math

import jax
import jax.numpy as jnp
from jax.experimental import pallas as pl
from jax.experimental.pallas import tpu as pltpu


def _round_up(x, m):
    return ((x + m - 1) // m) * m


def _cdiv(a, b):
    return -(-a // b)


_VMEM_LIMIT_BYTES = 48 * 1024 * 1024     # requested scoped-VMEM (< v7x 64 MiB/TC)
_VMEM_SOFT_BUDGET = 24 * 1024 * 1024     # target working set (headroom for scratch)
_RESIDENT_W_MAX = 4 * 1024 * 1024        # bf16 weight size that stays VMEM-resident


# ----------------------------- Pallas kernel ------------------------------ #
def _linear_nobias_kernel(x_ref, w_ref, o_ref):
    # x_ref: (tm, E)   activations tile in native dtype (cast here, on the VPU)
    # w_ref: (E, tn|O) bf16 pre-transposed weight tile (VMEM-resident when the
    #                  block index is constant across the grid)
    # o_ref: (tm, tn|O) output tile; f32 MXU accumulation, cast to out dtype.
    x_bf = x_ref[...].astype(jnp.bfloat16)
    o_ref[...] = jnp.dot(
        x_bf, w_ref[...], preferred_element_type=jnp.float32
    ).astype(o_ref.dtype)


def linear_no_bias(x2d, weight_t, *, out_dtype=None, tm_max=512, tn_max=512,
                   resident_weight_bytes=_RESIDENT_W_MAX):
    """y = x2d @ weight_t.   x2d: (M, E), weight_t: (E, O) bf16 -> (M, O)."""
    M, E = x2d.shape
    E2, O = weight_t.shape
    assert E == E2
    out_dtype = x2d.dtype if out_dtype is None else out_dtype

    xb = jnp.dtype(x2d.dtype).itemsize
    wb = jnp.dtype(weight_t.dtype).itemsize
    ob = jnp.dtype(out_dtype).itemsize

    w_bytes = E * O * wb
    m_ceil = _round_up(M, 8)

    if w_bytes <= resident_weight_bytes:
        # ---- Path A: weight fully VMEM-resident, 1-D grid over M tiles ---- #
        n_m = _cdiv(m_ceil, tm_max)
        tm = min(_round_up(_cdiv(m_ceil, n_m), 8), m_ceil)   # balanced M tile

        def est(tm_):
            # 2x = input/output double-buffering; weight also double-buffered
            # by the pipeline even though its block index never changes.
            return 2 * tm_ * E * xb + 2 * w_bytes + 2 * tm_ * O * ob

        while tm > 8 and est(tm) > _VMEM_SOFT_BUDGET:
            tm = _round_up(_cdiv(tm, 2), 8)
        vmem_est = est(tm)

        grid = (_cdiv(M, tm),)
        in_specs = [
            # x streams along the M grid axis; E kept whole (full extent).
            pl.BlockSpec((tm, E), lambda i: (i, 0)),
            # Constant block index -> single DMA, resident for the whole call.
            pl.BlockSpec((E, O), lambda i: (0, 0)),
        ]
        out_specs = pl.BlockSpec((tm, O), lambda i: (i, 0))
        dim_sem = ("parallel",)
        bytes_accessed = M * E * xb + w_bytes + M * O * ob
        flops = 2 * grid[0] * tm * E * O
    else:
        # ---- Path B: weight streamed, 2-D grid (M outer, O inner) --------- #
        # With M outer the (cheaper) bf16 weight is the re-streamed operand;
        # re-streaming f32 x instead would cost 2x the bytes per redundant pass.
        o_ceil = _round_up(O, 128)
        n_o = _cdiv(o_ceil, tn_max)
        tn = min(_round_up(_cdiv(o_ceil, n_o), 128), o_ceil)  # lane-dense tile
        n_m = _cdiv(m_ceil, tm_max)
        tm = min(_round_up(_cdiv(m_ceil, n_m), 8), m_ceil)

        def est(tm_, tn_):
            return 2 * tm_ * E * xb + 2 * E * tn_ * wb + 2 * tm_ * tn_ * ob

        while est(tm, tn) > _VMEM_SOFT_BUDGET and (tm > 8 or tn > 128):
            if tm >= tn and tm > 8:
                tm = _round_up(_cdiv(tm, 2), 8)
            elif tn > 128:
                tn = _round_up(_cdiv(tn, 2), 128)
            else:
                tm = _round_up(_cdiv(tm, 2), 8)
        vmem_est = est(tm, tn)

        grid = (_cdiv(M, tm), _cdiv(O, tn))
        in_specs = [
            pl.BlockSpec((tm, E), lambda i, j: (i, 0)),
            pl.BlockSpec((E, tn), lambda i, j: (0, j)),
        ]
        out_specs = pl.BlockSpec((tm, tn), lambda i, j: (i, j))
        dim_sem = ("parallel", "parallel")
        # Honest traffic: weight is re-fetched once per M tile (j is inner).
        bytes_accessed = M * E * xb + grid[0] * E * O * wb + M * O * ob
        flops = 2 * grid[0] * tm * grid[1] * tn * E

    cost = pl.CostEstimate(
        flops=flops, transcendentals=0, bytes_accessed=bytes_accessed
    )

    # Only raise the scoped-VMEM limit when the working set actually needs it.
    vmem_limit = _VMEM_LIMIT_BYTES if vmem_est > (12 * 1024 * 1024) else None

    return pl.pallas_call(
        _linear_nobias_kernel,
        out_shape=jax.ShapeDtypeStruct((M, O), out_dtype),
        grid_spec=pltpu.PrefetchScalarGridSpec(
            num_scalar_prefetch=0,
            grid=grid,
            in_specs=in_specs,
            out_specs=out_specs,
        ),
        compiler_params=pltpu.CompilerParams(
            dimension_semantics=dim_sem,
            vmem_limit_bytes=vmem_limit,
        ),
        cost_estimate=cost,
    )(x2d, weight_t)


# ----------------------------- Module wrapper ------------------------------ #
def xavier_uniform_fan_in(key, out_dim, in_dim, dtype=jnp.float32):
    # fan-in-only xavier/kaiming uniform: bound = sqrt(3 / fan_in)
    bound = math.sqrt(3.0 / in_dim)
    return jax.random.uniform(
        key, (out_dim, in_dim), dtype=dtype, minval=-bound, maxval=bound
    )


class EmbeddingBase:
    """JAX/Pallas port of RNNVAD EmbeddingBase's out_proj path."""

    # Below this FLOP count a plain fused matmul beats a Pallas launch.
    _PALLAS_MIN_FLOPS = 1 << 22

    def __init__(self, embedding_dim, output_dim, empty_base=False, *, key=None):
        self.embedding_dim = embedding_dim
        self.output_dim = output_dim
        self.empty_base = empty_base
        self.weight = None      # PyTorch layout (O, E), f32 master copy
        self.weight_t = None    # pre-transposed (E, O), bf16 kernel operand
        if not empty_base and embedding_dim != output_dim:
            w = xavier_uniform_fan_in(key, output_dim, embedding_dim)
            self.weight = w
            # NOTE: bf16 weight_t matches MXU-native inference numerics; the
            # f32 master is kept if training-parity with PyTorch is needed.
            self.weight_t = w.T.astype(jnp.bfloat16)

    def out_proj(self, x, *, use_pallas=None, out_dtype=None, **kernel_kwargs):
        """x: (..., embedding_dim) -> (..., output_dim) (or identity)."""
        if self.weight_t is None:
            return x  # nn.Identity()
        lead = x.shape[:-1]
        x2d = x.reshape(-1, self.embedding_dim)
        if use_pallas is None:
            flops = 2 * x2d.shape[0] * self.embedding_dim * self.output_dim
            use_pallas = flops >= self._PALLAS_MIN_FLOPS
        if use_pallas:
            y2d = linear_no_bias(x2d, self.weight_t, out_dtype=out_dtype,
                                 **kernel_kwargs)
        else:
            od = x.dtype if out_dtype is None else out_dtype
            y2d = jnp.dot(
                x2d.astype(jnp.bfloat16), self.weight_t,
                preferred_element_type=jnp.float32,
            ).astype(od)
        return y2d.reshape(*lead, self.output_dim)

    def forward(self, *args, **kwargs):
        # TODO(synk): forward() is abstract in the PyTorch base class; only
        # the out_proj Linear/Identity path is concrete here.
        raise NotImplementedError


# --------------------------------- main ------------------------------------ #
if __name__ == "__main__":
    key = jax.random.PRNGKey(0)
    k_w, k_x, k_w2, k_x2, k_w3, k_x3 = jax.random.split(key, 6)

    def _ref(x, mod):
        # Reference with bf16-quantized operands and f32 math (matches the
        # kernel's in-kernel bf16 cast + f32 MXU accumulation).
        x_q = x.astype(jnp.bfloat16).astype(jnp.float32)
        w_q = mod.weight_t.astype(jnp.float32)
        return jnp.einsum("...e,eo->...o", x_q, w_q)

    # --- test 1: small shapes, resident-weight path, single M tile --------- #
    batch, seq = 2, 8
    embedding_dim, output_dim = 32, 64
    mod = EmbeddingBase(embedding_dim, output_dim, key=k_w)
    x = jax.random.normal(k_x, (batch, seq, embedding_dim), dtype=jnp.float32)
    y = jax.block_until_ready(mod.out_proj(x, use_pallas=True))  # force kernel
    assert y.shape == (batch, seq, output_dim)
    assert jnp.allclose(y, _ref(x, mod), atol=1e-3, rtol=1e-3)

    # --- test 2: resident weight, multi-tile ragged M, non-128 O ----------- #
    b2, s2, e2, o2 = 3, 70, 96, 300   # M=210 -> 2 balanced row tiles of 112
    mod2 = EmbeddingBase(e2, o2, key=k_w2)
    x2 = jax.random.normal(k_x2, (b2, s2, e2), dtype=jnp.float32)
    y2 = jax.block_until_ready(mod2.out_proj(x2, use_pallas=True, tm_max=128))
    assert y2.shape == (b2, s2, o2)
    assert jnp.allclose(y2, _ref(x2, mod2), atol=1e-3, rtol=1e-3)

    # --- test 3: force the streamed-weight 2-D grid path -------------------- #
    b3, s3, e3, o3 = 4, 50, 64, 384   # M=200, 2x3 grid with ragged M tail
    mod3 = EmbeddingBase(e3, o3, key=k_w3)
    x3 = jax.random.normal(k_x3, (b3, s3, e3), dtype=jnp.float32)
    y3 = jax.block_until_ready(
        mod3.out_proj(x3, use_pallas=True, tm_max=128, tn_max=128,
                      resident_weight_bytes=0))
    assert y3.shape == (b3, s3, o3)
    assert jnp.allclose(y3, _ref(x3, mod3), atol=1e-3, rtol=1e-3)

    # --- test 4: bf16 output path (halves output HBM writeback) ------------ #
    y_bf = jax.block_until_ready(
        mod.out_proj(x, use_pallas=True, out_dtype=jnp.bfloat16))
    assert y_bf.dtype == jnp.bfloat16
    assert jnp.allclose(y_bf.astype(jnp.float32), _ref(x, mod),
                        atol=3e-2, rtol=3e-2)

    # --- identity paths (emb == out dim, and empty_base) -------------------- #
    mod_id = EmbeddingBase(embedding_dim, embedding_dim, key=k_w)
    assert jnp.array_equal(mod_id.out_proj(x), x)
    mod_empty = EmbeddingBase(embedding_dim, output_dim, empty_base=True)
    assert jnp.array_equal(mod_empty.out_proj(x), x)

    print("KERNEL_OK")
</pallas_src>

<mosaic_0001>
module attributes {stable_mosaic.version = 11 : i64} {
  func.func @_linear_nobias_kernel(%arg0: i32, %arg1: memref<16x32xf32, #tpu.memory_space<vmem>>, %arg2: memref<32x64xbf16, #tpu.memory_space<vmem>>, %arg3: memref<16x64xf32, #tpu.memory_space<vmem>>) attributes {dimension_semantics = [#tpu.dimension_semantics<parallel>], iteration_bounds = array<i64: 1>, scalar_prefetch = 0 : i64, scratch_operands = 0 : i64, tpu.core_type = #tpu.core_type<tc>, window_params = [{transform_indices = @transform_0, window_bounds = array<i64: 16, 32>}, {pipeline_mode = #tpu.pipeline_mode<synchronous>, transform_indices = @transform_1, window_bounds = array<i64: 32, 64>}, {transform_indices = @transform_2, window_bounds = array<i64: 16, 64>}]} {
    %c0 = arith.constant 0 : index
    %c0_0 = arith.constant 0 : index
    %0 = vector.load %arg1[%c0, %c0_0] : memref<16x32xf32, #tpu.memory_space<vmem>>, vector<16x32xf32>
    %1 = arith.truncf %0 : vector<16x32xf32> to vector<16x32xbf16>
    %c0_1 = arith.constant 0 : index
    %c0_2 = arith.constant 0 : index
    %2 = vector.load %arg2[%c0_1, %c0_2] : memref<32x64xbf16, #tpu.memory_space<vmem>>, vector<32x64xbf16>
    %cst = arith.constant dense<0.000000e+00> : vector<16x64xf32>
    %3 = tpu.matmul %1, %2, %cst {dimension_numbers = #tpu.dot_dimension_numbers<[1], [0], [0], [1], [0, 0, 1, 1], [], []>} : vector<16x32xbf16>, vector<32x64xbf16>, vector<16x64xf32> -> vector<16x64xf32>
    %c0_3 = arith.constant 0 : index
    %c0_4 = arith.constant 0 : index
    %4 = vector.load %arg3[%c0_3, %c0_4] : memref<16x64xf32, #tpu.memory_space<vmem>>, vector<16x64xf32>
    tpu.vector_store %arg3[%c0_3, %c0_4], %3 {strides = array<i32>} : memref<16x64xf32, #tpu.memory_space<vmem>>, vector<16x64xf32>,
    return
  }
  func.func @transform_0(%arg0: i32) -> (i32, i32) {
    %c0_i32 = arith.constant 0 : i32
    %c0_i32_0 = arith.constant 0 : i32
    return %arg0, %c0_i32 : i32, i32
  }
  func.func @transform_1(%arg0: i32) -> (i32, i32) {
    %c0_i32 = arith.constant 0 : i32
    %c0_i32_0 = arith.constant 0 : i32
    %c0_i32_1 = arith.constant 0 : i32
    return %c0_i32, %c0_i32_0 : i32, i32
  }
  func.func @transform_2(%arg0: i32) -> (i32, i32) {
    %c0_i32 = arith.constant 0 : i32
    %c0_i32_0 = arith.constant 0 : i32
    return %arg0, %c0_i32 : i32, i32
  }
}

</mosaic_0001>

<llo_original>
// kernel: tpu_custom_call.1
$region0: #{tpu_custom_call.1}
  #allocation0 [shape = 'u32[]', space=smem, size = 0x4, offset = 0x4, fixed_abs, tag = 'smem constant byte address 0x4 - core index']
  #allocation1 [shape = 'u32[72,128]{1,0:T(1,128)}', space=vmem, size = 0x9000, scoped, tag = 'internal scratch']
  %s0 = inlined_call_operand.hbm [shape: f32[16,32], index: 0, kind: input, shape index: {}]
  %s1 = inlined_call_operand.hbm [shape: bf16[32,64], index: 1, kind: input, shape index: {}]
  %s2 = inlined_call_operand.hbm [shape: f32[16,64], index: 2, kind: output, shape index: {}]
  %s3 = sld [smem:[#allocation0]]
  $region26: #{tpu_custom_call.1} parent=0
    _
  %s5 = ssub.s32 1, %s3
  %s6 = scalar_select 0, %s5, %s3
  $region1: #{tpu_custom_call.1} parent=0
    #allocation2 [shape = 'u8[8192]{0}', space=vmem, size = 0x2000, scoped, tag = 'input window, operand 0, single buffered']
    #allocation3 [shape = 's32[1]{0}', space=sflag, size = 0x4, scoped, tag = 'scoped memory for tpu_custom_call.1']
    #allocation4 [shape = 's32[1]{0}', space=sflag, size = 0x4, scoped, tag = 'scoped memory for tpu_custom_call.1']
    #allocation5 [shape = 'u8[8192]{0}', space=vmem, size = 0x2000, scoped, tag = 'input window, operand 1, single buffered']
    #allocation6 [shape = 's32[1]{0}', space=sflag, size = 0x4, scoped, tag = 'scoped memory for tpu_custom_call.1']
    #allocation7 [shape = 'u8[8192]{0}', space=vmem, size = 0x2000, scoped, tag = 'output window, operand 0, single buffered']
    %7 = vsyncpa [#allocation3], 0
    %8 = vsyncpa [#allocation6], 0
    %9 = vsyncpa [#allocation4], 0
    // Predicated region
    $region2: #{tpu_custom_call.1} parent=1 // pred_check
      _
    $region3: #{tpu_custom_call.1} parent=1 // pred_check_branch
      %11 = sbr.rel (0) target = $region5
    $region4: #{tpu_custom_call.1} parent=1 // pred_region
      %13 = vsyncadd [#allocation3], 0
      %s14 = sshll.u32 %s0, 4
      %s15 = int_to_ptr.hbm [resolvable:$true] %s14
      %s16 = sshll.u32 [#allocation2], 4
      %s17 = int_to_ptr.vmem [resolvable:$true] %s16
      %22 = dma.hbm_to_vmem [thread:$0]  %s15, 256, %s17, [#allocation3], 128, 128, 8
    $region5: #{tpu_custom_call.1} parent=1 // pred_fallthru
      _
    // Predicated region
    $region6: #{tpu_custom_call.1} parent=1 // pred_check
      _
    $region7: #{tpu_custom_call.1} parent=1 // pred_check_branch
      %24 = sbr.rel (0) target = $region9
    $region8: #{tpu_custom_call.1} parent=1 // pred_region
      %26 = vsyncadd [#allocation6], 0
      %s27 = sshll.u32 %s1, 4
      %s28 = int_to_ptr.hbm [resolvable:$true] %s27
      %s29 = sshll.u32 [#allocation5], 4
      %s30 = int_to_ptr.vmem [resolvable:$true] %s29
      %35 = dma.hbm_to_vmem [thread:$0]  %s28, 256, %s30, [#allocation6], 64, 64, 4
    $region9: #{tpu_custom_call.1} parent=1 // pred_fallthru
      _
    // Predicated region
    $region10: #{tpu_custom_call.1} parent=1 // pred_check
      _
    $region11: #{tpu_custom_call.1} parent=1 // pred_check_branch
      %37 = sbr.rel (0) target = $region13
    $region12: #{tpu_custom_call.1} parent=1 // pred_region
      %39 = dma.done [#allocation3], 256
    $region13: #{tpu_custom_call.1} parent=1 // pred_fallthru
      _
    // Predicated region
    $region14: #{tpu_custom_call.1} parent=1 // pred_check
      _
    $region15: #{tpu_custom_call.1} parent=1 // pred_check_branch
      %41 = sbr.rel (0) target = $region17
    $region16: #{tpu_custom_call.1} parent=1 // pred_region
      %43 = dma.done [#allocation6], 256
    $region17: #{tpu_custom_call.1} parent=1 // pred_fallthru
      _
    %v45 = vld [vmem:[#allocation2] sm:$0xff]
    %v46 = vld [vmem:[#allocation2 + $0x8] sm:$0xff]
    %v47 = vpack.c.bf16 %v46, %v45
    %v48 = vld [vmem:[#allocation5] sm:$0xf]
    %v49 = vld [vmem:[#allocation5 + $0x4] sm:$0xf]
    %v50 = vld [vmem:[#allocation5 + $0x8] sm:$0xf]
    %v51 = vld [vmem:[#allocation5 + $0xc] sm:$0xf]
    %v56 = vunpack.c.l.b16 %v48
    %v57 = vunpack.c.l.b16 %v49
    %v58 = vunpack.c.l.b16 %v50
    %v59 = vunpack.c.l.b16 %v51
    %v60 = vpack.c.b16 %v57, %v56
    %v61 = vpack.c.b16 %v59, %v58
    %vm64 = vcmask 261120
    %v66 = vsel %vm64, %v47, 0
    %68 = vmatpush.bf16.msra.mxu0 0
    %69 = vmatpush.bf16.msra.mxu0 0
    %70 = vmatpush.bf16.msra.mxu0 0
    %71 = vmatpush.bf16.msra.mxu0 0
    %72 = vmatpush.bf16.msra.mxu0 0
    %73 = vmatpush.bf16.msra.mxu0 0
    %74 = vmatpush.bf16.msra.mxu0 %v61
    %75 = vmatpush.bf16.msra.mxu0 %v60
    %76 = vmatmul.bf16.gmra.mxu0 %v66
    %v77 = vpop.f32.mrf.mxu0
    %v78 = vadd.f32 0.0, %v77
    %v79 = vpop.f32.mrf.mxu0
    %v80 = vadd.f32 0.0, %v79
    %81 = vdwg.mxu0
    %vm82 = vcmask 523264
    %83 = vst.msk [vmem:[#allocation7] sm:$0xff] %vm82, %v78
    %84 = vst.msk [vmem:[#allocation7 + $0x8] sm:$0xff] %vm82, %v80
    // Predicated region
    $region18: #{tpu_custom_call.1} parent=1 // pred_check
      _
    $region19: #{tpu_custom_call.1} parent=1 // pred_check_branch
      %86 = sbr.rel (0) target = $region21
    $region20: #{tpu_custom_call.1} parent=1 // pred_region
      %88 = vsyncadd [#allocation4], 0
      %s89 = sshll.u32 [#allocation7], 4
      %s90 = int_to_ptr.vmem [resolvable:$true] %s89
      %s91 = sshll.u32 %s2, 4
      %s92 = int_to_ptr.hbm [resolvable:$true] %s91
      %97 = dma.vmem_to_hbm [thread:$0]  %s90, 256, %s92, [#allocation4], 128, 128, 8
    $region21: #{tpu_custom_call.1} parent=1 // pred_fallthru
      _
    // Predicated region
    $region22: #{tpu_custom_call.1} parent=1 // pred_check
      _
    $region23: #{tpu_custom_call.1} parent=1 // pred_check_branch
      %99 = sbr.rel (0) target = $region25
    $region24: #{tpu_custom_call.1} parent=1 // pred_region
      %101 = dma.done [#allocation4], 256
    $region25: #{tpu_custom_call.1} parent=1 // pred_fallthru
      _
    %102 = vsyncpa [#allocation3], 1
    %103 = vsyncpa [#allocation6], 1
    %104 = vsyncpa [#allocation4], 1

</llo_original>
